<compile_context>
chip_gen: v5e
topology: v5e:2x2
jax: 0.10.0
libtpu: 0.0.40
codegen_flags: <defaults>
</compile_context>

<pallas_src>
import numpy as np
import jax
import jax.numpy as jnp
from jax.experimental import pallas as pl
from jax.experimental.pallas import tpu as pltpu


# ---------------------------------------------------------------------------
# Pallas kernel: one (batch tile, H tile) step of relu(x@W1+b1) @ W2 + b2
# ---------------------------------------------------------------------------
def _sparse_encoder_kernel(x_ref, w1_ref, b1_ref, w2_ref, b2_ref, o_ref,
                           h_ref, acc_ref):
    hk = pl.program_id(1)

    @pl.when(hk == 0)
    def _init():
        acc_ref[...] = jnp.zeros_like(acc_ref)

    # Stage 1 (per-block Linear + ReLU, concat implicit in block-diagonal W1):
    # f32 accumulation, then store the intermediate already in the second matmul's
    # input dtype (halves scratch footprint / store traffic on bf16 paths).
    h = jnp.dot(x_ref[...], w1_ref[...], preferred_element_type=jnp.float32)
    h = h + b1_ref[...].astype(jnp.float32)
    h_ref[...] = jnp.maximum(h, 0.0).astype(h_ref.dtype)

    # Stage 2 ("transformer" Linear): accumulate this H-chunk's contribution in f32.
    acc_ref[...] += jnp.dot(h_ref[...], w2_ref[...],
                            preferred_element_type=jnp.float32)

    @pl.when(hk == pl.num_programs(1) - 1)
    def _finalize():
        o_ref[...] = (acc_ref[...] + b2_ref[...].astype(jnp.float32)).astype(o_ref.dtype)


# ---------------------------------------------------------------------------
# Wrapper helpers
# ---------------------------------------------------------------------------
def _round_up(x, m):
    return (int(x) + m - 1) // m * m


def _pad_axis(a, axis, target):
    pad = target - a.shape[axis]
    if pad <= 0:
        return a
    widths = [(0, 0)] * a.ndim
    widths[axis] = (0, pad)
    return jnp.pad(a, widths)


def _vmem_capacity_bytes():
    """Physical VMEM per TensorCore (64 MiB on v7x, 128 MiB on v5e/v6e); safe fallback."""
    try:
        return int(pltpu.get_tpu_info().vmem_capacity_bytes)
    except Exception:
        return 64 << 20


def _choose_tiles(n, d_pad, h, r_pad, act_isz, comp_isz, budget, cap_n, sub,
                  prefer_two_tiles, force_tile_h=None):
    """Pick (tile_h, tile_n) against the VMEM budget.

    Accounts for Pallas' default 2x pipeline buffers on every input (weights included,
    even with constant index maps), the compute-dtype intermediate scratch and the f32
    accumulator scratch.
    """
    h_full = _round_up(h, 128)
    if force_tile_h is not None:
        cands = [int(force_tile_h)]
    else:
        cands = [h_full]
        th = 2048
        while th >= 128:
            if th < h_full:
                cands.append(th)
            th //= 2

    chosen = None
    for tile_h in cands:
        # Weights/biases: 2x pipeline-buffered even though their index maps are constant.
        fixed = 2 * ((d_pad * tile_h + tile_h * r_pad) * comp_isz
                     + (tile_h + r_pad) * act_isz)
        per_row = (2 * d_pad * comp_isz     # x tile (double buffered)
                   + 2 * r_pad * act_isz    # out tile (double buffered)
                   + tile_h * comp_isz      # ReLU'd intermediate scratch
                   + r_pad * 4)             # f32 accumulator scratch
        avail = budget - fixed
        if avail <= 0:
            continue
        tile_n = int(avail // per_row)
        if tile_n >= min(256, _round_up(n, sub)) or tile_h == cands[-1]:
            chosen = (tile_h, tile_n)
            break
    if chosen is None:
        chosen = (cands[-1], 8)
    tile_h, tile_n = chosen

    # Clamp + align: never pad a small batch out to a huge tile; align to MXU pass
    # height where possible, and always to the compute dtype's sublane packing.
    tile_n = max(sub, min(tile_n, cap_n, _round_up(n, sub)))
    if tile_n >= 256:
        tile_n = (tile_n // 256) * 256
    elif tile_n >= 128:
        tile_n = 128
    else:
        tile_n = max(sub, (tile_n // sub) * sub)

    # On 2-TensorCore parts, make sure a medium batch yields >= 2 grid steps so the
    # "parallel" batch axis actually shards across cores.
    if prefer_two_tiles and tile_n >= n and n >= 2 * sub:
        tile_n = max(sub, _round_up((n + 1) // 2, sub))

    return tile_h, tile_n


# ---------------------------------------------------------------------------
# Forward: padding, tile selection, pallas_call
# ---------------------------------------------------------------------------
def sparse_encoder_forward(x, w1, b1, w2, b2, *, tile_n=None, tile_h=None,
                           compute_dtype=None):
    N, D = x.shape
    H = w1.shape[1]
    R = w2.shape[1]

    out_dtype = x.dtype
    comp_dtype = jnp.dtype(compute_dtype) if compute_dtype is not None else jnp.dtype(x.dtype)
    act_isz = jnp.dtype(x.dtype).itemsize
    comp_isz = comp_dtype.itemsize

    D_pad = _round_up(D, 128)
    R_pad = _round_up(R, 128)

    capacity = _vmem_capacity_bytes()
    budget = int(capacity * 0.70)           # planning budget (leaves headroom)
    cap_n = 512 if capacity <= (64 << 20) else 1024
    sub = {4: 8, 2: 16, 1: 32}.get(comp_isz, 8)
    prefer_two_tiles = capacity <= (64 << 20)   # v7x-like (2 TensorCores, 64 MiB/TC)

    if tile_n is None or tile_h is None:
        auto_th, auto_tn = _choose_tiles(N, D_pad, H, R_pad, act_isz, comp_isz,
                                         budget, cap_n, sub, prefer_two_tiles,
                                         force_tile_h=tile_h)
        if tile_h is None:
            tile_h = auto_th
        if tile_n is None:
            tile_n = auto_tn
    tile_h = int(tile_h)
    tile_n = int(tile_n)

    H_pad = _round_up(H, tile_h)
    num_h = H_pad // tile_h

    N_pad = _round_up(max(N, tile_n), tile_n)
    num_n = N_pad // tile_n

    # Pad everything to lane/tile multiples; cast MXU operands to the compute dtype
    # (biases stay in the original dtype, accumulation stays f32).
    x_p = _pad_axis(_pad_axis(x, 1, D_pad), 0, N_pad).astype(comp_dtype)
    w1_p = _pad_axis(_pad_axis(w1, 0, D_pad), 1, H_pad).astype(comp_dtype)
    b1_p = _pad_axis(b1, 1, H_pad)
    w2_p = _pad_axis(_pad_axis(w2, 0, H_pad), 1, R_pad).astype(comp_dtype)
    b2_p = _pad_axis(b2, 1, R_pad)

    cost = pl.CostEstimate(
        flops=2 * N_pad * (D_pad * H_pad + H_pad * R_pad),
        transcendentals=0,
        bytes_accessed=(N_pad * D_pad + N_pad * R_pad) * act_isz
                       + num_n * (D_pad * H_pad + H_pad * R_pad) * comp_isz,
    )

    out = pl.pallas_call(
        _sparse_encoder_kernel,
        out_shape=jax.ShapeDtypeStruct((N_pad, R_pad), out_dtype),
        grid=(num_n, num_h),
        in_specs=[
            pl.BlockSpec((tile_n, D_pad), lambda i, h: (i, 0)),   # x: tiled over batch
            pl.BlockSpec((D_pad, tile_h), lambda i, h: (0, h)),   # W1 column chunk
            pl.BlockSpec((1, tile_h),     lambda i, h: (0, h)),   # b1 chunk
            pl.BlockSpec((tile_h, R_pad), lambda i, h: (h, 0)),   # W2 row chunk
            pl.BlockSpec((1, R_pad),      lambda i, h: (0, 0)),   # b2
        ],
        out_specs=pl.BlockSpec((tile_n, R_pad), lambda i, h: (i, 0)),
        scratch_shapes=[
            pltpu.VMEM((tile_n, tile_h), comp_dtype),   # ReLU'd intermediate (compute dtype)
            pltpu.VMEM((tile_n, R_pad), jnp.float32),   # second-matmul accumulator
        ],
        compiler_params=pltpu.CompilerParams(
            dimension_semantics=("parallel", "arbitrary"),
            vmem_limit_bytes=int(capacity * 0.80),
        ),
        cost_estimate=cost,
    )(x_p, w1_p, b1_p, w2_p, b2_p)

    return out[:N, :R]


# ---------------------------------------------------------------------------
# Parameter construction (deterministic, PyTorch-Linear-style uniform init)
# ---------------------------------------------------------------------------
def init_sparse_encoder_params(key, d_ins, d_intrs, d_reduced, dtype=jnp.float32):
    d_in_total = int(np.sum(d_ins))
    d_concat_intrs = int(np.sum(d_intrs))

    w1 = jnp.zeros((d_in_total, d_concat_intrs), dtype=dtype)  # block-diagonal
    b1 = jnp.zeros((1, d_concat_intrs), dtype=dtype)

    row_off = 0
    col_off = 0
    for d_in, d_intr in zip(d_ins, d_intrs):
        key, kw, kb = jax.random.split(key, 3)
        bound = 1.0 / np.sqrt(d_in)
        w_blk = jax.random.uniform(kw, (d_in, d_intr), dtype=dtype,
                                   minval=-bound, maxval=bound)
        b_blk = jax.random.uniform(kb, (1, d_intr), dtype=dtype,
                                   minval=-bound, maxval=bound)
        w1 = w1.at[row_off:row_off + d_in, col_off:col_off + d_intr].set(w_blk)
        b1 = b1.at[:, col_off:col_off + d_intr].set(b_blk)
        row_off += d_in
        col_off += d_intr

    key, kw, kb = jax.random.split(key, 3)
    bound = 1.0 / np.sqrt(d_concat_intrs)
    w2 = jax.random.uniform(kw, (d_concat_intrs, d_reduced), dtype=dtype,
                            minval=-bound, maxval=bound)
    b2 = jax.random.uniform(kb, (1, d_reduced), dtype=dtype,
                            minval=-bound, maxval=bound)
    return w1, b1, w2, b2


# Pure-JAX reference (divide -> per-block fc+relu -> concat -> fc), for verification.
def sparse_encoder_ref(x, d_ins, d_intrs, w1, b1, w2, b2):
    outs = []
    row_off = 0
    col_off = 0
    for d_in, d_intr in zip(d_ins, d_intrs):
        x_blk = x[:, row_off:row_off + d_in]
        w_blk = w1[row_off:row_off + d_in, col_off:col_off + d_intr]
        b_blk = b1[:, col_off:col_off + d_intr]
        outs.append(jnp.maximum(x_blk @ w_blk + b_blk, 0.0))
        row_off += d_in
        col_off += d_intr
    y_intr = jnp.concatenate(outs, axis=1)
    return y_intr @ w2 + b2


if __name__ == "__main__":
    key = jax.random.PRNGKey(0)

    # --- Test 1: small shapes consistent with the module's forward (single H tile) ---
    d_ins = [4, 6, 6]       # per-block input feature sizes (sum = 16)
    d_intrs = [8, 8, 16]    # per-block intermediate sizes (sum = 32)
    d_reduced = 8
    N = 2

    key, kx, kp = jax.random.split(key, 3)
    x = jax.random.normal(kx, (N, int(np.sum(d_ins))), dtype=jnp.float32)
    w1, b1, w2, b2 = init_sparse_encoder_params(kp, d_ins, d_intrs, d_reduced)

    y = jax.block_until_ready(sparse_encoder_forward(x, w1, b1, w2, b2))
    y_ref = sparse_encoder_ref(x, d_ins, d_intrs, w1, b1, w2, b2)
    np.testing.assert_allclose(np.asarray(y), np.asarray(y_ref), rtol=1e-5, atol=1e-5)

    # --- Test 2: force H-tiling (2 reduction steps) to exercise the accumulator path ---
    d_ins2 = [4, 6, 6]
    d_intrs2 = [64, 64, 64]   # sum = 192 -> H_pad = 256 with tile_h = 128 -> 2 H tiles
    d_reduced2 = 8
    key, kx2, kp2 = jax.random.split(key, 3)
    x2 = jax.random.normal(kx2, (N, int(np.sum(d_ins2))), dtype=jnp.float32)
    w1_2, b1_2, w2_2, b2_2 = init_sparse_encoder_params(kp2, d_ins2, d_intrs2, d_reduced2)

    y2 = jax.block_until_ready(
        sparse_encoder_forward(x2, w1_2, b1_2, w2_2, b2_2, tile_h=128))
    y2_ref = sparse_encoder_ref(x2, d_ins2, d_intrs2, w1_2, b1_2, w2_2, b2_2)
    np.testing.assert_allclose(np.asarray(y2), np.asarray(y2_ref), rtol=1e-5, atol=1e-5)

    # --- Test 3: bf16 MXU compute path (f32 accumulation); smoke-run only, numerics differ ---
    y3 = jax.block_until_ready(
        sparse_encoder_forward(x, w1, b1, w2, b2, compute_dtype=jnp.bfloat16))
    assert y3.shape == (N, d_reduced)

    print("KERNEL_OK")
</pallas_src>

<mosaic_0001>
module attributes {stable_mosaic.version = 11 : i64} {
  func.func @_sparse_encoder_kernel(%arg0: i32, %arg1: i32, %arg2: memref<8x128xf32, #tpu.memory_space<vmem>>, %arg3: memref<128x128xf32, #tpu.memory_space<vmem>>, %arg4: memref<1x128xf32, #tpu.memory_space<vmem>>, %arg5: memref<128x128xf32, #tpu.memory_space<vmem>>, %arg6: memref<1x128xf32, #tpu.memory_space<vmem>>, %arg7: memref<8x128xf32, #tpu.memory_space<vmem>>, %arg8: memref<8x128xf32, #tpu.memory_space<vmem>>, %arg9: memref<8x128xf32, #tpu.memory_space<vmem>>) attributes {dimension_semantics = [#tpu.dimension_semantics<parallel>, #tpu.dimension_semantics<arbitrary>], iteration_bounds = array<i64: 1, 1>, scalar_prefetch = 0 : i64, scratch_operands = 2 : i64, tpu.core_type = #tpu.core_type<tc>, window_params = [{transform_indices = @transform_0, window_bounds = array<i64: 8, 128>}, {transform_indices = @transform_1, window_bounds = array<i64: 128, 128>}, {transform_indices = @transform_2, window_bounds = array<i64: 1, 128>}, {transform_indices = @transform_3, window_bounds = array<i64: 128, 128>}, {pipeline_mode = #tpu.pipeline_mode<synchronous>, transform_indices = @transform_4, window_bounds = array<i64: 1, 128>}, {transform_indices = @transform_5, window_bounds = array<i64: 8, 128>}]} {
    %c0_i32 = arith.constant 0 : i32
    %0 = arith.cmpi eq, %arg1, %c0_i32 : i32
    %1 = arith.extui %0 : i1 to i32
    %c0_i32_0 = arith.constant 0 : i32
    %2 = arith.cmpi ne, %1, %c0_i32_0 : i32
    scf.if %2 {
      %cst_20 = arith.constant 0.000000e+00 : f32
      %21 = vector.broadcast %cst_20 : f32 to vector<8x128xf32>
      %c0_21 = arith.constant 0 : index
      %c0_22 = arith.constant 0 : index
      %22 = vector.load %arg9[%c0_21, %c0_22] : memref<8x128xf32, #tpu.memory_space<vmem>>, vector<8x128xf32>
      tpu.vector_store %arg9[%c0_21, %c0_22], %21 {strides = array<i32>} : memref<8x128xf32, #tpu.memory_space<vmem>>, vector<8x128xf32>,
    } else {
    }
    %c0 = arith.constant 0 : index
    %c0_1 = arith.constant 0 : index
    %3 = vector.load %arg2[%c0, %c0_1] : memref<8x128xf32, #tpu.memory_space<vmem>>, vector<8x128xf32>
    %c0_2 = arith.constant 0 : index
    %c0_3 = arith.constant 0 : index
    %4 = vector.load %arg3[%c0_2, %c0_3] : memref<128x128xf32, #tpu.memory_space<vmem>>, vector<128x128xf32>
    %cst = arith.constant dense<0.000000e+00> : vector<8x128xf32>
    %5 = tpu.matmul %3, %4, %cst {dimension_numbers = #tpu.dot_dimension_numbers<[1], [0], [0], [1], [0, 0, 1, 1], [], []>} : vector<8x128xf32>, vector<128x128xf32>, vector<8x128xf32> -> vector<8x128xf32>
    %c0_4 = arith.constant 0 : index
    %c0_5 = arith.constant 0 : index
    %6 = vector.load %arg4[%c0_4, %c0_5] : memref<1x128xf32, #tpu.memory_space<vmem>>, vector<1x128xf32>
    %7 = vector.broadcast %6 : vector<1x128xf32> to vector<8x128xf32>
    %8 = arith.addf %5, %7 : vector<8x128xf32>
    %cst_6 = arith.constant 0.000000e+00 : f32
    %9 = vector.broadcast %cst_6 : f32 to vector<8x128xf32>
    %10 = arith.maximumf %8, %9 : vector<8x128xf32>
    %c0_7 = arith.constant 0 : index
    %c0_8 = arith.constant 0 : index
    %11 = vector.load %arg8[%c0_7, %c0_8] : memref<8x128xf32, #tpu.memory_space<vmem>>, vector<8x128xf32>
    tpu.vector_store %arg8[%c0_7, %c0_8], %10 {strides = array<i32>} : memref<8x128xf32, #tpu.memory_space<vmem>>, vector<8x128xf32>,
    %c0_9 = arith.constant 0 : index
    %c0_10 = arith.constant 0 : index
    %12 = vector.load %arg9[%c0_9, %c0_10] : memref<8x128xf32, #tpu.memory_space<vmem>>, vector<8x128xf32>
    %c0_11 = arith.constant 0 : index
    %c0_12 = arith.constant 0 : index
    %13 = vector.load %arg8[%c0_11, %c0_12] : memref<8x128xf32, #tpu.memory_space<vmem>>, vector<8x128xf32>
    %c0_13 = arith.constant 0 : index
    %c0_14 = arith.constant 0 : index
    %14 = vector.load %arg5[%c0_13, %c0_14] : memref<128x128xf32, #tpu.memory_space<vmem>>, vector<128x128xf32>
    %cst_15 = arith.constant dense<0.000000e+00> : vector<8x128xf32>
    %15 = tpu.matmul %13, %14, %cst_15 {dimension_numbers = #tpu.dot_dimension_numbers<[1], [0], [0], [1], [0, 0, 1, 1], [], []>} : vector<8x128xf32>, vector<128x128xf32>, vector<8x128xf32> -> vector<8x128xf32>
    %16 = arith.addf %12, %15 : vector<8x128xf32>
    %c0_16 = arith.constant 0 : index
    %c0_17 = arith.constant 0 : index
    %17 = vector.load %arg9[%c0_16, %c0_17] : memref<8x128xf32, #tpu.memory_space<vmem>>, vector<8x128xf32>
    tpu.vector_store %arg9[%c0_16, %c0_17], %16 {strides = array<i32>} : memref<8x128xf32, #tpu.memory_space<vmem>>, vector<8x128xf32>,
    %c0_i32_18 = arith.constant 0 : i32
    %18 = arith.cmpi eq, %arg1, %c0_i32_18 : i32
    %19 = arith.extui %18 : i1 to i32
    %c0_i32_19 = arith.constant 0 : i32
    %20 = arith.cmpi ne, %19, %c0_i32_19 : i32
    scf.if %20 {
      %c0_20 = arith.constant 0 : index
      %c0_21 = arith.constant 0 : index
      %21 = vector.load %arg9[%c0_20, %c0_21] : memref<8x128xf32, #tpu.memory_space<vmem>>, vector<8x128xf32>
      %c0_22 = arith.constant 0 : index
      %c0_23 = arith.constant 0 : index
      %22 = vector.load %arg6[%c0_22, %c0_23] : memref<1x128xf32, #tpu.memory_space<vmem>>, vector<1x128xf32>
      %23 = vector.broadcast %22 : vector<1x128xf32> to vector<8x128xf32>
      %24 = arith.addf %21, %23 : vector<8x128xf32>
      %c0_24 = arith.constant 0 : index
      %c0_25 = arith.constant 0 : index
      %25 = vector.load %arg7[%c0_24, %c0_25] : memref<8x128xf32, #tpu.memory_space<vmem>>, vector<8x128xf32>
      tpu.vector_store %arg7[%c0_24, %c0_25], %24 {strides = array<i32>} : memref<8x128xf32, #tpu.memory_space<vmem>>, vector<8x128xf32>,
    } else {
    }
    return
  }
  func.func @transform_0(%arg0: i32, %arg1: i32) -> (i32, i32) {
    %c0_i32 = arith.constant 0 : i32
    %c0_i32_0 = arith.constant 0 : i32
    return %arg0, %c0_i32 : i32, i32
  }
  func.func @transform_1(%arg0: i32, %arg1: i32) -> (i32, i32) {
    %c0_i32 = arith.constant 0 : i32
    %c0_i32_0 = arith.constant 0 : i32
    return %c0_i32, %arg1 : i32, i32
  }
  func.func @transform_2(%arg0: i32, %arg1: i32) -> (i32, i32) {
    %c0_i32 = arith.constant 0 : i32
    %c0_i32_0 = arith.constant 0 : i32
    return %c0_i32, %arg1 : i32, i32
  }
  func.func @transform_3(%arg0: i32, %arg1: i32) -> (i32, i32) {
    %c0_i32 = arith.constant 0 : i32
    %c0_i32_0 = arith.constant 0 : i32
    return %arg1, %c0_i32 : i32, i32
  }
  func.func @transform_4(%arg0: i32, %arg1: i32) -> (i32, i32) {
    %c0_i32 = arith.constant 0 : i32
    %c0_i32_0 = arith.constant 0 : i32
    %c0_i32_1 = arith.constant 0 : i32
    return %c0_i32, %c0_i32_0 : i32, i32
  }
  func.func @transform_5(%arg0: i32, %arg1: i32) -> (i32, i32) {
    %c0_i32 = arith.constant 0 : i32
    %c0_i32_0 = arith.constant 0 : i32
    return %arg0, %c0_i32 : i32, i32
  }
}

</mosaic_0001>

<llo_original>
// kernel: tpu_custom_call.1
$region0: #{tpu_custom_call.1}
  #allocation0 [shape = 'u32[]', space=smem, size = 0x4, offset = 0x4, fixed_abs, tag = 'smem constant byte address 0x4 - core index']
  #allocation1 [shape = 'u32[72,128]{1,0:T(1,128)}', space=vmem, size = 0x9000, scoped, tag = 'internal scratch']
  #allocation2 [shape = 'f32[8,128]{1,0:T(8,128)}', space=vmem, size = 0x1000, scoped, tag = 'scratch operand']
  #allocation3 [shape = 'f32[8,128]{1,0:T(8,128)}', space=vmem, size = 0x1000, scoped, tag = 'scratch operand']
  %s0 = inlined_call_operand.hbm [shape: f32[8,128], index: 0, kind: input, shape index: {}]
  %s1 = inlined_call_operand.hbm [shape: f32[128,128], index: 1, kind: input, shape index: {}]
  %s2 = inlined_call_operand.vmem [shape: f32[1,128], index: 2, kind: input, shape index: {}]
  %s3 = inlined_call_operand.hbm [shape: f32[128,128], index: 3, kind: input, shape index: {}]
  %s4 = inlined_call_operand.vmem [shape: f32[1,128], index: 4, kind: input, shape index: {}]
  %s5 = inlined_call_operand.hbm [shape: f32[8,128], index: 5, kind: output, shape index: {}]
  %s6 = sld [smem:[#allocation0]]
  $region50: #{tpu_custom_call.1} parent=0
    _
  %s8 = ssub.s32 1, %s6
  %s9 = scalar_select 0, %s8, %s6
  $region1: #{tpu_custom_call.1} parent=0
    #allocation4 [shape = 'u8[4096]{0}', space=vmem, size = 0x1000, scoped, tag = 'input window, operand 0, single buffered']
    #allocation5 [shape = 's32[1]{0}', space=sflag, size = 0x4, scoped, tag = 'scoped memory for tpu_custom_call.1']
    #allocation6 [shape = 's32[1]{0}', space=sflag, size = 0x4, scoped, tag = 'scoped memory for tpu_custom_call.1']
    #allocation7 [shape = 'u8[65536]{0}', space=vmem, size = 0x10000, scoped, tag = 'input window, operand 1, single buffered']
    #allocation8 [shape = 's32[1]{0}', space=sflag, size = 0x4, scoped, tag = 'scoped memory for tpu_custom_call.1']
    #allocation9 [shape = 'u8[65536]{0}', space=vmem, size = 0x10000, scoped, tag = 'input window, operand 3, single buffered']
    #allocation10 [shape = 'u8[4096]{0}', space=vmem, size = 0x1000, scoped, tag = 'output window, operand 0, single buffered']
    %10 = vsyncpa [#allocation5], 0
    %11 = vsyncpa [#allocation8], 0
    %12 = vsyncpa [#allocation6], 0
    // Predicated region
    $region2: #{tpu_custom_call.1} parent=1 // pred_check
      _
    $region3: #{tpu_custom_call.1} parent=1 // pred_check_branch
      %14 = sbr.rel (0) target = $region5
    $region4: #{tpu_custom_call.1} parent=1 // pred_region
      %16 = vsyncadd [#allocation5], 0
      %s18 = sshll.u32 %s0, 4
      %s19 = int_to_ptr.hbm [resolvable:$true] %s18
      %s20 = sshll.u32 [#allocation4], 4
      %s21 = int_to_ptr.vmem [resolvable:$true] %s20
      %23 = dma.hbm_to_vmem [thread:$0]  %s19, 128, %s21, [#allocation5]
    $region5: #{tpu_custom_call.1} parent=1 // pred_fallthru
      _
    // Predicated region
    $region6: #{tpu_custom_call.1} parent=1 // pred_check
      _
    $region7: #{tpu_custom_call.1} parent=1 // pred_check_branch
      %25 = sbr.rel (0) target = $region9
    $region8: #{tpu_custom_call.1} parent=1 // pred_region
      %27 = vsyncadd [#allocation8], 0
      %s28 = sshll.u32 %s1, 4
      %s29 = int_to_ptr.hbm [resolvable:$true] %s28
      %s30 = sshll.u32 [#allocation7], 4
      %s31 = int_to_ptr.vmem [resolvable:$true] %s30
      %36 = dma.hbm_to_vmem [thread:$0]  %s29, 2048, %s31, [#allocation8], 128, 128, 8
    $region9: #{tpu_custom_call.1} parent=1 // pred_fallthru
      _
    // Predicated region
    $region10: #{tpu_custom_call.1} parent=1 // pred_check
      _
    $region11: #{tpu_custom_call.1} parent=1 // pred_check_branch
      %38 = sbr.rel (0) target = $region13
    $region12: #{tpu_custom_call.1} parent=1 // pred_region
      _
    $region13: #{tpu_custom_call.1} parent=1 // pred_fallthru
      _
    // Predicated region
    $region14: #{tpu_custom_call.1} parent=1 // pred_check
      _
    $region15: #{tpu_custom_call.1} parent=1 // pred_check_branch
      %40 = sbr.rel (0) target = $region17
    $region16: #{tpu_custom_call.1} parent=1 // pred_region
      %42 = vsyncadd [#allocation8], 0
      %s43 = sshll.u32 %s3, 4
      %s44 = int_to_ptr.hbm [resolvable:$true] %s43
      %s45 = sshll.u32 [#allocation9], 4
      %s46 = int_to_ptr.vmem [resolvable:$true] %s45
      %51 = dma.hbm_to_vmem [thread:$0]  %s44, 2048, %s46, [#allocation8], 128, 128, 8
    $region17: #{tpu_custom_call.1} parent=1 // pred_fallthru
      _
    // Predicated region
    $region18: #{tpu_custom_call.1} parent=1 // pred_check
      _
    $region19: #{tpu_custom_call.1} parent=1 // pred_check_branch
      %53 = sbr.rel (0) target = $region21
    $region20: #{tpu_custom_call.1} parent=1 // pred_region
      _
    $region21: #{tpu_custom_call.1} parent=1 // pred_fallthru
      _
    // Predicated region
    $region22: #{tpu_custom_call.1} parent=1 // pred_check
      _
    $region23: #{tpu_custom_call.1} parent=1 // pred_check_branch
      %55 = sbr.rel (0) target = $region25
    $region24: #{tpu_custom_call.1} parent=1 // pred_region
      %57 = dma.done [#allocation5], 128
    $region25: #{tpu_custom_call.1} parent=1 // pred_fallthru
      _
    // Predicated region
    $region26: #{tpu_custom_call.1} parent=1 // pred_check
      _
    $region27: #{tpu_custom_call.1} parent=1 // pred_check_branch
      %59 = sbr.rel (0) target = $region29
    $region28: #{tpu_custom_call.1} parent=1 // pred_region
      %61 = dma.done [#allocation8], 2048
    $region29: #{tpu_custom_call.1} parent=1 // pred_fallthru
      _
    // Predicated region
    $region30: #{tpu_custom_call.1} parent=1 // pred_check
      _
    $region31: #{tpu_custom_call.1} parent=1 // pred_check_branch
      %63 = sbr.rel (0) target = $region33
    $region32: #{tpu_custom_call.1} parent=1 // pred_region
      %65 = dma.done [#allocation8], 2048
    $region33: #{tpu_custom_call.1} parent=1 // pred_fallthru
      _
    %p66 = scmp.eq.s32.totalorder 0, 0
    // Predicated region
    $region34: #{tpu_custom_call.1} parent=1 // pred_check
      %p67 = pneg %p66
    $region35: #{tpu_custom_call.1} parent=1 // pred_check_branch
      %69 = sbr.rel (%p67) target = $region37
    $region36: #{tpu_custom_call.1} parent=1 // pred_region
      %70 = vst [vmem:[#allocation3] sm:$0xff] 0.0
    $region37: #{tpu_custom_call.1} parent=1 // pred_fallthru
      _
    %v71 = vld [vmem:[#allocation4] sm:$0xff]
    %v72 = vld [vmem:[#allocation7] sm:$0xff]
    %v73 = vld [vmem:[#allocation7 + $0x8] sm:$0xff]
    %v74 = vld [vmem:[#allocation7 + $0x10] sm:$0xff]
    %v75 = vld [vmem:[#allocation7 + $0x18] sm:$0xff]
    %v76 = vld [vmem:[#allocation7 + $0x20] sm:$0xff]
    %v77 = vld [vmem:[#allocation7 + $0x28] sm:$0xff]
    %v78 = vld [vmem:[#allocation7 + $0x30] sm:$0xff]
    %v79 = vld [vmem:[#allocation7 + $0x38] sm:$0xff]
    %v80 = vld [vmem:[#allocation7 + $0x40] sm:$0xff]
    %v81 = vld [vmem:[#allocation7 + $0x48] sm:$0xff]
    %v82 = vld [vmem:[#allocation7 + $0x50] sm:$0xff]
    %v83 = vld [vmem:[#allocation7 + $0x58] sm:$0xff]
    %v84 = vld [vmem:[#allocation7 + $0x60] sm:$0xff]
    %v85 = vld [vmem:[#allocation7 + $0x68] sm:$0xff]
    %v86 = vld [vmem:[#allocation7 + $0x70] sm:$0xff]
    %v87 = vld [vmem:[#allocation7 + $0x78] sm:$0xff]
    %v88 = vld [vmem:[%s2] sm:$0x1]
    %v90 = vperm.slane %v88, 0
    %92 = vmatpush.msra.mxu0 %v87
    %93 = vmatpush.msra.mxu0 %v86
    %94 = vmatpush.msra.mxu0 %v85
    %95 = vmatpush.msra.mxu0 %v84
    %96 = vmatpush.msra.mxu0 %v83
    %97 = vmatpush.msra.mxu0 %v82
    %98 = vmatpush.msra.mxu0 %v81
    %99 = vmatpush.msra.mxu0 %v80
    %100 = vmatpush.msra.mxu0 %v79
    %101 = vmatpush.msra.mxu0 %v78
    %102 = vmatpush.msra.mxu0 %v77
    %103 = vmatpush.msra.mxu0 %v76
    %104 = vmatpush.msra.mxu0 %v75
    %105 = vmatpush.msra.mxu0 %v74
    %106 = vmatpush.msra.mxu0 %v73
    %107 = vmatpush.msra.mxu0 %v72
    %108 = vmatmul.f32.gmra.mxu0 %v71
    %v109 = vpop.f32.mrf.mxu0
    %v110 = vadd.f32 %v90, %v109
    %111 = vdwg.mxu0
    %v112 = vmax.f32 %v110, 0.0
    %113 = vst [vmem:[#allocation2] sm:$0xff] %v112
    %v114 = vld [vmem:[#allocation3] sm:$0xff]
    %v115 = vld [vmem:[#allocation2] sm:$0xff]
    %v116 = vld [vmem:[#allocation9] sm:$0xff]
    %v117 = vld [vmem:[#allocation9 + $0x8] sm:$0xff]
    %v118 = vld [vmem:[#allocation9 + $0x10] sm:$0xff]
    %v119 = vld [vmem:[#allocation9 + $0x18] sm:$0xff]
    %v120 = vld [vmem:[#allocation9 + $0x20] sm:$0xff]
    %v121 = vld [vmem:[#allocation9 + $0x28] sm:$0xff]
    %v122 = vld [vmem:[#allocation9 + $0x30] sm:$0xff]
    %v123 = vld [vmem:[#allocation9 + $0x38] sm:$0xff]
    %v124 = vld [vmem:[#allocation9 + $0x40] sm:$0xff]
    %v125 = vld [vmem:[#allocation9 + $0x48] sm:$0xff]
    %v126 = vld [vmem:[#allocation9 + $0x50] sm:$0xff]
    %v127 = vld [vmem:[#allocation9 + $0x58] sm:$0xff]
    %v128 = vld [vmem:[#allocation9 + $0x60] sm:$0xff]
    %v129 = vld [vmem:[#allocation9 + $0x68] sm:$0xff]
    %v130 = vld [vmem:[#allocation9 + $0x70] sm:$0xff]
    %v131 = vld [vmem:[#allocation9 + $0x78] sm:$0xff]
    %132 = vmatpush.msra.mxu0 %v131
    %133 = vmatpush.msra.mxu0 %v130
    %134 = vmatpush.msra.mxu0 %v129
    %135 = vmatpush.msra.mxu0 %v128
    %136 = vmatpush.msra.mxu0 %v127
    %137 = vmatpush.msra.mxu0 %v126
    %138 = vmatpush.msra.mxu0 %v125
    %139 = vmatpush.msra.mxu0 %v124
    %140 = vmatpush.msra.mxu0 %v123
    %141 = vmatpush.msra.mxu0 %v122
    %142 = vmatpush.msra.mxu0 %v121
    %143 = vmatpush.msra.mxu0 %v120
    %144 = vmatpush.msra.mxu0 %v119
    %145 = vmatpush.msra.mxu0 %v118
    %146 = vmatpush.msra.mxu0 %v117
    %147 = vmatpush.msra.mxu0 %v116
    %148 = vmatmul.f32.gmra.mxu0 %v115
    %v149 = vpop.f32.mrf.mxu0
    %v150 = vadd.f32 0.0, %v149
    %151 = vdwg.mxu0
    %v152 = vadd.f32 %v114, %v150
    %153 = vst [vmem:[#allocation3] sm:$0xff] %v152
    // Predicated region
    $region38: #{tpu_custom_call.1} parent=1 // pred_check
      %p154 = pneg %p66
    $region39: #{tpu_custom_call.1} parent=1 // pred_check_branch
      %156 = sbr.rel (%p154) target = $region41
    $region40: #{tpu_custom_call.1} parent=1 // pred_region
      %v157 = vld [vmem:[#allocation3] sm:$0xff]
      %v158 = vld [vmem:[%s4] sm:$0x1]
      %v160 = vperm.slane %v158, 0
      %v162 = vadd.f32 %v157, %v160
      %163 = vst [vmem:[#allocation10] sm:$0xff] %v162
    $region41: #{tpu_custom_call.1} parent=1 // pred_fallthru
      _
    // Predicated region
    $region42: #{tpu_custom_call.1} parent=1 // pred_check
      _
    $region43: #{tpu_custom_call.1} parent=1 // pred_check_branch
      %165 = sbr.rel (0) target = $region45
    $region44: #{tpu_custom_call.1} parent=1 // pred_region
      %167 = vsyncadd [#allocation6], 0
      %s169 = sshll.u32 [#allocation10], 4
      %s170 = int_to_ptr.vmem [resolvable:$true] %s169
      %s171 = sshll.u32 %s5, 4
      %s172 = int_to_ptr.hbm [resolvable:$true] %s171
      %174 = dma.vmem_to_hbm [thread:$0]  %s170, 128, %s172, [#allocation6]
    $region45: #{tpu_custom_call.1} parent=1 // pred_fallthru
      _
    // Predicated region
    $region46: #{tpu_custom_call.1} parent=1 // pred_check
      _
    $region47: #{tpu_custom_call.1} parent=1 // pred_check_branch
      %176 = sbr.rel (0) target = $region49
    $region48: #{tpu_custom_call.1} parent=1 // pred_region
      %178 = dma.done [#allocation6], 128
    $region49: #{tpu_custom_call.1} parent=1 // pred_fallthru
      _
    %179 = vsyncpa [#allocation5], 1
    %180 = vsyncpa [#allocation8], 1
    %181 = vsyncpa [#allocation6], 1

</llo_original>
